<compile_context>
chip_gen: v6e
topology: v6e:2x2x1
jax: 0.10.0
libtpu: 0.0.40
codegen_flags: <defaults>
</compile_context>

<pallas_src>
import functools

import jax
import jax.numpy as jnp
import numpy as np
from jax import lax
from jax.experimental import pallas as pl
from jax.experimental.pallas import tpu as pltpu

STATE_DIM = 25
ACTION_DIM = 5
SA_DIM = STATE_DIM + ACTION_DIM   # 30
H1 = 64
H2 = 32

# Per-tile footprint at 8192 rows is ~1-2 MiB double-buffered inputs plus
# ~3 MiB of f32 intermediates -> safe on v5e/v6e (128 MiB VMEM) and v7x (64 MiB).
MAX_TILE_B = 8192


def _round_up(x, m):
    return ((x + m - 1) // m) * m


def critic_kernel(state_ref, action_ref, w1_ref, b1_ref, w2_ref, b2_ref,
                  w3_ref, b3_ref, q_ref):
    # ---- fused concat: [state, action] built in VMEM (XLU shift/select) ----
    sa = jnp.concatenate([state_ref[...], action_ref[...]], axis=1)  # (T, 30) f32
    sa_bf = sa.astype(jnp.bfloat16)

    # ---- fc1: single (T,30)x(30,64) bf16 MXU pass, f32 accumulate ----------
    h1 = jnp.dot(sa_bf, w1_ref[...], preferred_element_type=jnp.float32)
    h1 = jnp.maximum(h1 + b1_ref[...], 0.0)                          # f32 VPU

    # ---- fc2: (T,64)x(64,32) bf16 -------------------------------------------
    h2 = jnp.dot(h1.astype(jnp.bfloat16), w2_ref[...],
                 preferred_element_type=jnp.float32)
    h2 = jnp.maximum(h2 + b2_ref[...], 0.0)                          # (T, 32) f32

    # ---- fc3: lane-dense (1,32) . (T,32)^T -> (1, T) ------------------------
    q_row = lax.dot_general(
        w3_ref[...], h2.astype(jnp.bfloat16),
        dimension_numbers=(((1,), (1,)), ((), ())),                  # contract K=32
        preferred_element_type=jnp.float32)                          # (1, T)
    q_ref[...] = q_row + b3_ref[...]                                 # b3 is (1, 1)


@functools.partial(jax.jit, static_argnames=("max_tile_b",))
def critic_forward(state, action, params, *, max_tile_b=MAX_TILE_B):
    w1, b1, w2, b2, w3, b3 = params
    state = state.astype(jnp.float32)
    action = action.astype(jnp.float32)
    # bf16 dot operands (weights are tiny and stay VMEM-resident across tiles).
    w1 = w1.astype(jnp.bfloat16)
    w2 = w2.astype(jnp.bfloat16)
    w3 = w3.astype(jnp.bfloat16)

    B = state.shape[0]

    # Only pad when the batch is smaller than one (8, lane) sublane tile; all
    # other ragged batches are handled by Pallas' partial last block (garbage
    # rows are row-independent and sliced off below), avoiding a full HBM copy.
    if B < 8:  # static at trace time
        pad = 8 - B
        state = jnp.pad(state, ((0, pad), (0, 0)))
        action = jnp.pad(action, ((0, pad), (0, 0)))
    b_eff = state.shape[0]

    # >= 2 batch tiles whenever possible so "parallel" batch tiles can be
    # sharded across v7x's two TensorCores; capped at MAX_TILE_B.
    tile_b = max(8, min(max_tile_b, _round_up(pl.cdiv(b_eff, 2), 8)))
    num_tiles = pl.cdiv(b_eff, tile_b)

    def batch_spec(feat):
        return pl.BlockSpec((tile_b, feat), lambda i: (i, 0))

    def const_spec(r, c):
        return pl.BlockSpec((r, c), lambda i: (0, 0))

    flops = 2 * B * (SA_DIM * H1 + H1 * H2 + H2 * 1)
    bytes_accessed = (B * (SA_DIM * 4 + 4)                       # inputs + q
                      + 2 * (SA_DIM * H1 + H1 * H2 + H2)         # bf16 weights
                      + 4 * (H1 + H2 + 1))                       # f32 biases
    cost = pl.CostEstimate(flops=flops, transcendentals=0,
                           bytes_accessed=bytes_accessed)

    out = pl.pallas_call(
        critic_kernel,
        out_shape=jax.ShapeDtypeStruct((num_tiles, 1, tile_b), jnp.float32),
        grid_spec=pltpu.PrefetchScalarGridSpec(
            num_scalar_prefetch=0,
            grid=(num_tiles,),
            in_specs=[
                batch_spec(STATE_DIM),       # state  (tile_b, 25)  pipelined
                batch_spec(ACTION_DIM),      # action (tile_b, 5)   pipelined
                const_spec(SA_DIM, H1),      # w1     (30, 64) bf16, resident
                const_spec(1, H1),           # b1     (1, 64)  f32,  resident
                const_spec(H1, H2),          # w2     (64, 32) bf16, resident
                const_spec(1, H2),           # b2     (1, 32)  f32,  resident
                const_spec(1, H2),           # w3 row (1, 32)  bf16, resident
                const_spec(1, 1),            # b3     (1, 1)   f32,  resident
            ],
            out_specs=pl.BlockSpec((None, 1, tile_b), lambda i: (i, 0, 0)),
        ),
        compiler_params=pltpu.CompilerParams(
            dimension_semantics=("parallel",)),
        cost_estimate=cost,
    )(state, action, w1, b1, w2, b2, w3, b3)

    # (num_tiles, 1, tile_b) rows are in batch order -> (B, 1); rows past B
    # (ragged last tile) are discarded here.
    return out.reshape(num_tiles * tile_b, 1)[:B]


def init_params(key):
    """Deterministic init mimicking nn.Linear's U(-1/sqrt(fan_in), +1/sqrt(fan_in))."""
    ks = jax.random.split(key, 6)

    def lin(kw, kb, fan_in, fan_out):
        bound = 1.0 / np.sqrt(fan_in)
        w = jax.random.uniform(kw, (fan_in, fan_out), jnp.float32, -bound, bound)
        b = jax.random.uniform(kb, (1, fan_out), jnp.float32, -bound, bound)
        return w, b

    w1, b1 = lin(ks[0], ks[1], SA_DIM, H1)
    w2, b2 = lin(ks[2], ks[3], H1, H2)
    w3, b3 = lin(ks[4], ks[5], H2, 1)
    # fc3 weight stored as a (1, 32) row; b3 as (1, 1).
    return (w1, b1, w2, b2, w3.T, b3)


def critic_forward_ref_f32(state, action, params):
    """Plain-JAX f32 reference (matches the PyTorch forward exactly)."""
    w1, b1, w2, b2, w3, b3 = params
    sa = jnp.concatenate([state, action], axis=1)
    h = jnp.maximum(sa @ w1 + b1, 0.0)
    h = jnp.maximum(h @ w2 + b2, 0.0)
    return h @ w3.T + b3


def critic_forward_ref_bf16(state, action, params):
    """Plain-JAX reference mirroring the kernel's bf16-operand / f32-accum math."""
    w1, b1, w2, b2, w3, b3 = params
    bf = jnp.bfloat16
    sa = jnp.concatenate([state, action], axis=1).astype(bf)
    h = jnp.dot(sa, w1.astype(bf), preferred_element_type=jnp.float32)
    h = jnp.maximum(h + b1, 0.0)
    h = jnp.dot(h.astype(bf), w2.astype(bf), preferred_element_type=jnp.float32)
    h = jnp.maximum(h + b2, 0.0)
    q = jnp.dot(h.astype(bf), w3.astype(bf).T, preferred_element_type=jnp.float32)
    return q + b3


if __name__ == "__main__":
    key = jax.random.PRNGKey(0)
    k_state, k_action, k_params = jax.random.split(key, 3)
    params = init_params(k_params)

    # Small smoke test (single tile).
    B = 8
    state = jax.random.normal(k_state, (B, STATE_DIM), jnp.float32)
    action = jax.random.normal(k_action, (B, ACTION_DIM), jnp.float32)
    q = critic_forward(state, action, params)
    jax.block_until_ready(q)
    assert q.shape == (B, 1)
    # Tight check vs. a reference using the same bf16-operand math...
    np.testing.assert_allclose(np.asarray(q),
                               np.asarray(critic_forward_ref_bf16(state, action, params)),
                               rtol=2e-3, atol=2e-3)
    # ...and a loose check vs. the exact f32 PyTorch-equivalent forward.
    np.testing.assert_allclose(np.asarray(q),
                               np.asarray(critic_forward_ref_f32(state, action, params)),
                               rtol=5e-2, atol=5e-2)

    # Exercise the multi-tile + ragged-last-block path (3 tiles of 128, B=300).
    B2 = 300
    state2 = jax.random.normal(k_state, (B2, STATE_DIM), jnp.float32)
    action2 = jax.random.normal(k_action, (B2, ACTION_DIM), jnp.float32)
    q2 = critic_forward(state2, action2, params, max_tile_b=128)
    jax.block_until_ready(q2)
    assert q2.shape == (B2, 1)
    np.testing.assert_allclose(np.asarray(q2),
                               np.asarray(critic_forward_ref_bf16(state2, action2, params)),
                               rtol=2e-3, atol=2e-3)
    np.testing.assert_allclose(np.asarray(q2),
                               np.asarray(critic_forward_ref_f32(state2, action2, params)),
                               rtol=5e-2, atol=5e-2)

    print("KERNEL_OK")
</pallas_src>

<mosaic_0001>
module attributes {stable_mosaic.version = 11 : i64} {
  func.func @critic_kernel(%arg0: i32, %arg1: memref<8x25xf32, #tpu.memory_space<vmem>>, %arg2: memref<8x5xf32, #tpu.memory_space<vmem>>, %arg3: memref<30x64xbf16, #tpu.memory_space<vmem>>, %arg4: memref<1x64xf32, #tpu.memory_space<vmem>>, %arg5: memref<64x32xbf16, #tpu.memory_space<vmem>>, %arg6: memref<1x32xf32, #tpu.memory_space<vmem>>, %arg7: memref<1x32xbf16, #tpu.memory_space<vmem>>, %arg8: memref<1x1xf32, #tpu.memory_space<vmem>>, %arg9: memref<1x1x8xf32, #tpu.memory_space<vmem>>) attributes {dimension_semantics = [#tpu.dimension_semantics<parallel>], iteration_bounds = array<i64: 1>, scalar_prefetch = 0 : i64, scratch_operands = 0 : i64, tpu.core_type = #tpu.core_type<tc>, window_params = [{transform_indices = @transform_0, window_bounds = array<i64: 8, 25>}, {transform_indices = @transform_1, window_bounds = array<i64: 8, 5>}, {pipeline_mode = #tpu.pipeline_mode<synchronous>, transform_indices = @transform_2, window_bounds = array<i64: 30, 64>}, {pipeline_mode = #tpu.pipeline_mode<synchronous>, transform_indices = @transform_3, window_bounds = array<i64: 1, 64>}, {pipeline_mode = #tpu.pipeline_mode<synchronous>, transform_indices = @transform_4, window_bounds = array<i64: 64, 32>}, {pipeline_mode = #tpu.pipeline_mode<synchronous>, transform_indices = @transform_5, window_bounds = array<i64: 1, 32>}, {pipeline_mode = #tpu.pipeline_mode<synchronous>, transform_indices = @transform_6, window_bounds = array<i64: 1, 32>}, {pipeline_mode = #tpu.pipeline_mode<synchronous>, transform_indices = @transform_7, window_bounds = array<i64: 1, 1>}, {transform_indices = @transform_8, window_bounds = array<i64: 1, 1, 8>}]} {
    %c0 = arith.constant 0 : index
    %c0_0 = arith.constant 0 : index
    %0 = vector.load %arg1[%c0, %c0_0] : memref<8x25xf32, #tpu.memory_space<vmem>>, vector<8x25xf32>
    %c0_1 = arith.constant 0 : index
    %c0_2 = arith.constant 0 : index
    %1 = vector.load %arg2[%c0_1, %c0_2] : memref<8x5xf32, #tpu.memory_space<vmem>>, vector<8x5xf32>
    %2 = tpu.concatenate %0, %1 in 1 : vector<8x25xf32>, vector<8x5xf32> -> vector<8x30xf32>
    %3 = arith.truncf %2 : vector<8x30xf32> to vector<8x30xbf16>
    %c0_3 = arith.constant 0 : index
    %c0_4 = arith.constant 0 : index
    %4 = vector.load %arg3[%c0_3, %c0_4] : memref<30x64xbf16, #tpu.memory_space<vmem>>, vector<30x64xbf16>
    %cst = arith.constant dense<0.000000e+00> : vector<8x64xf32>
    %5 = tpu.matmul %3, %4, %cst {dimension_numbers = #tpu.dot_dimension_numbers<[1], [0], [0], [1], [0, 0, 1, 1], [], []>} : vector<8x30xbf16>, vector<30x64xbf16>, vector<8x64xf32> -> vector<8x64xf32>
    %c0_5 = arith.constant 0 : index
    %c0_6 = arith.constant 0 : index
    %6 = vector.load %arg4[%c0_5, %c0_6] : memref<1x64xf32, #tpu.memory_space<vmem>>, vector<1x64xf32>
    %7 = vector.broadcast %6 : vector<1x64xf32> to vector<8x64xf32>
    %8 = arith.addf %5, %7 : vector<8x64xf32>
    %cst_7 = arith.constant 0.000000e+00 : f32
    %9 = vector.broadcast %cst_7 : f32 to vector<8x64xf32>
    %10 = arith.maximumf %8, %9 : vector<8x64xf32>
    %11 = arith.truncf %10 : vector<8x64xf32> to vector<8x64xbf16>
    %c0_8 = arith.constant 0 : index
    %c0_9 = arith.constant 0 : index
    %12 = vector.load %arg5[%c0_8, %c0_9] : memref<64x32xbf16, #tpu.memory_space<vmem>>, vector<64x32xbf16>
    %cst_10 = arith.constant dense<0.000000e+00> : vector<8x32xf32>
    %13 = tpu.matmul %11, %12, %cst_10 {dimension_numbers = #tpu.dot_dimension_numbers<[1], [0], [0], [1], [0, 0, 1, 1], [], []>} : vector<8x64xbf16>, vector<64x32xbf16>, vector<8x32xf32> -> vector<8x32xf32>
    %c0_11 = arith.constant 0 : index
    %c0_12 = arith.constant 0 : index
    %14 = vector.load %arg6[%c0_11, %c0_12] : memref<1x32xf32, #tpu.memory_space<vmem>>, vector<1x32xf32>
    %15 = vector.broadcast %14 : vector<1x32xf32> to vector<8x32xf32>
    %16 = arith.addf %13, %15 : vector<8x32xf32>
    %cst_13 = arith.constant 0.000000e+00 : f32
    %17 = vector.broadcast %cst_13 : f32 to vector<8x32xf32>
    %18 = arith.maximumf %16, %17 : vector<8x32xf32>
    %c0_14 = arith.constant 0 : index
    %c0_15 = arith.constant 0 : index
    %19 = vector.load %arg7[%c0_14, %c0_15] : memref<1x32xbf16, #tpu.memory_space<vmem>>, vector<1x32xbf16>
    %20 = arith.truncf %18 : vector<8x32xf32> to vector<8x32xbf16>
    %cst_16 = arith.constant dense<0.000000e+00> : vector<1x8xf32>
    %21 = tpu.matmul %19, %20, %cst_16 {dimension_numbers = #tpu.dot_dimension_numbers<[1], [1], [0], [0], [0, 0, 1, 0], [], []>} : vector<1x32xbf16>, vector<8x32xbf16>, vector<1x8xf32> -> vector<1x8xf32>
    %c0_17 = arith.constant 0 : index
    %c0_18 = arith.constant 0 : index
    %22 = vector.load %arg8[%c0_17, %c0_18] : memref<1x1xf32, #tpu.memory_space<vmem>>, vector<1x1xf32>
    %23 = vector.broadcast %22 : vector<1x1xf32> to vector<1x8xf32>
    %24 = arith.addf %21, %23 : vector<1x8xf32>
    %c0_19 = arith.constant 0 : index
    %c0_20 = arith.constant 0 : index
    %c0_21 = arith.constant 0 : index
    %25 = vector.load %arg9[%c0_19, %c0_20, %c0_21] : memref<1x1x8xf32, #tpu.memory_space<vmem>>, vector<1x1x8xf32>
    %26 = vector.shape_cast %25 : vector<1x1x8xf32> to vector<1x8xf32>
    %27 = vector.shape_cast %24 : vector<1x8xf32> to vector<1x1x8xf32>
    tpu.vector_store %arg9[%c0_19, %c0_20, %c0_21], %27 {strides = array<i32>} : memref<1x1x8xf32, #tpu.memory_space<vmem>>, vector<1x1x8xf32>,
    return
  }
  func.func @transform_0(%arg0: i32) -> (i32, i32) {
    %c0_i32 = arith.constant 0 : i32
    %c0_i32_0 = arith.constant 0 : i32
    return %arg0, %c0_i32 : i32, i32
  }
  func.func @transform_1(%arg0: i32) -> (i32, i32) {
    %c0_i32 = arith.constant 0 : i32
    %c0_i32_0 = arith.constant 0 : i32
    return %arg0, %c0_i32 : i32, i32
  }
  func.func @transform_2(%arg0: i32) -> (i32, i32) {
    %c0_i32 = arith.constant 0 : i32
    %c0_i32_0 = arith.constant 0 : i32
    %c0_i32_1 = arith.constant 0 : i32
    return %c0_i32, %c0_i32_0 : i32, i32
  }
  func.func @transform_3(%arg0: i32) -> (i32, i32) {
    %c0_i32 = arith.constant 0 : i32
    %c0_i32_0 = arith.constant 0 : i32
    %c0_i32_1 = arith.constant 0 : i32
    return %c0_i32, %c0_i32_0 : i32, i32
  }
  func.func @transform_4(%arg0: i32) -> (i32, i32) {
    %c0_i32 = arith.constant 0 : i32
    %c0_i32_0 = arith.constant 0 : i32
    %c0_i32_1 = arith.constant 0 : i32
    return %c0_i32, %c0_i32_0 : i32, i32
  }
  func.func @transform_5(%arg0: i32) -> (i32, i32) {
    %c0_i32 = arith.constant 0 : i32
    %c0_i32_0 = arith.constant 0 : i32
    %c0_i32_1 = arith.constant 0 : i32
    return %c0_i32, %c0_i32_0 : i32, i32
  }
  func.func @transform_6(%arg0: i32) -> (i32, i32) {
    %c0_i32 = arith.constant 0 : i32
    %c0_i32_0 = arith.constant 0 : i32
    %c0_i32_1 = arith.constant 0 : i32
    return %c0_i32, %c0_i32_0 : i32, i32
  }
  func.func @transform_7(%arg0: i32) -> (i32, i32) {
    %c0_i32 = arith.constant 0 : i32
    %c0_i32_0 = arith.constant 0 : i32
    %c0_i32_1 = arith.constant 0 : i32
    return %c0_i32, %c0_i32_0 : i32, i32
  }
  func.func @transform_8(%arg0: i32) -> (i32, i32, i32) {
    %c0_i32 = arith.constant 0 : i32
    %c0_i32_0 = arith.constant 0 : i32
    %c0_i32_1 = arith.constant 0 : i32
    return %arg0, %c0_i32, %c0_i32_0 : i32, i32, i32
  }
}

</mosaic_0001>

<llo_original>
// kernel: critic_forward.1
$region0: #{critic_forward.1}
  #allocation0 [shape = 'u32[]', space=smem, size = 0x4, offset = 0x4, fixed_abs, tag = 'smem constant byte address 0x4 - core index']
  #allocation1 [shape = 'u32[144,128]{1,0:T(1,128)}', space=vmem, size = 0x12000, scoped, tag = 'internal scratch']
  #allocation2 [shape = 'f32[1,1]{1,0:T(1,128)S(1)}', space=vmem, size = 0x200, scoped, tag = 'scoped memory for critic_forward.1']
  %s0 = inlined_call_operand.vmem [shape: f32[8,25], index: 0, kind: input, shape index: {}]
  %s1 = inlined_call_operand.vmem [shape: f32[8,5], index: 1, kind: input, shape index: {}]
  %s2 = inlined_call_operand.vmem [shape: bf16[30,64], index: 2, kind: input, shape index: {}]
  %s3 = inlined_call_operand.vmem [shape: f32[1,64], index: 3, kind: input, shape index: {}]
  %s4 = inlined_call_operand.vmem [shape: bf16[64,32], index: 4, kind: input, shape index: {}]
  %s5 = inlined_call_operand.vmem [shape: f32[1,32], index: 5, kind: input, shape index: {}]
  %s6 = inlined_call_operand.vmem [shape: bf16[1,32], index: 6, kind: input, shape index: {}]
  %s7 = inlined_call_operand.<no memory space> [shape: f32[1,1], index: 7, kind: input, shape index: {}]
  %s8 = inlined_call_operand.hbm [shape: f32[1,1,8], index: 8, kind: output, shape index: {}]
  %s9 = sld [smem:[#allocation0]]
  $region42: #{critic_forward.1} parent=0
    _
  %s11 = ssub.s32 1, %s9
  %s12 = scalar_select 0, %s11, %s9
  %v13 = vstv %s7
  %14 = vst [vmem:[#allocation2] sm:$0x1] %v13
  $region1: #{critic_forward.1} parent=0
    #allocation3 [shape = 'u8[512]{0}', space=vmem, size = 0x400, scoped, tag = 'output window, operand 0, single buffered']
    #allocation4 [shape = 's32[1]{0}', space=sflag, size = 0x4, scoped, tag = 'scoped memory for critic_forward.1']
    %15 = vsyncpa [#allocation4], 0
    // Predicated region
    $region2: #{critic_forward.1} parent=1 // pred_check
      _
    $region3: #{critic_forward.1} parent=1 // pred_check_branch
      %17 = sbr.rel (0) target = $region5
    $region4: #{critic_forward.1} parent=1 // pred_region
      _
    $region5: #{critic_forward.1} parent=1 // pred_fallthru
      _
    // Predicated region
    $region6: #{critic_forward.1} parent=1 // pred_check
      _
    $region7: #{critic_forward.1} parent=1 // pred_check_branch
      %19 = sbr.rel (0) target = $region9
    $region8: #{critic_forward.1} parent=1 // pred_region
      _
    $region9: #{critic_forward.1} parent=1 // pred_fallthru
      _
    // Predicated region
    $region10: #{critic_forward.1} parent=1 // pred_check
      _
    $region11: #{critic_forward.1} parent=1 // pred_check_branch
      %21 = sbr.rel (0) target = $region13
    $region12: #{critic_forward.1} parent=1 // pred_region
      _
    $region13: #{critic_forward.1} parent=1 // pred_fallthru
      _
    // Predicated region
    $region14: #{critic_forward.1} parent=1 // pred_check
      _
    $region15: #{critic_forward.1} parent=1 // pred_check_branch
      %23 = sbr.rel (0) target = $region17
    $region16: #{critic_forward.1} parent=1 // pred_region
      _
    $region17: #{critic_forward.1} parent=1 // pred_fallthru
      _
    // Predicated region
    $region18: #{critic_forward.1} parent=1 // pred_check
      _
    $region19: #{critic_forward.1} parent=1 // pred_check_branch
      %25 = sbr.rel (0) target = $region21
    $region20: #{critic_forward.1} parent=1 // pred_region
      _
    $region21: #{critic_forward.1} parent=1 // pred_fallthru
      _
    // Predicated region
    $region22: #{critic_forward.1} parent=1 // pred_check
      _
    $region23: #{critic_forward.1} parent=1 // pred_check_branch
      %27 = sbr.rel (0) target = $region25
    $region24: #{critic_forward.1} parent=1 // pred_region
      _
    $region25: #{critic_forward.1} parent=1 // pred_fallthru
      _
    // Predicated region
    $region26: #{critic_forward.1} parent=1 // pred_check
      _
    $region27: #{critic_forward.1} parent=1 // pred_check_branch
      %29 = sbr.rel (0) target = $region29
    $region28: #{critic_forward.1} parent=1 // pred_region
      _
    $region29: #{critic_forward.1} parent=1 // pred_fallthru
      _
    // Predicated region
    $region30: #{critic_forward.1} parent=1 // pred_check
      _
    $region31: #{critic_forward.1} parent=1 // pred_check_branch
      %31 = sbr.rel (0) target = $region33
    $region32: #{critic_forward.1} parent=1 // pred_region
      _
    $region33: #{critic_forward.1} parent=1 // pred_fallthru
      _
    %v33 = vld [vmem:[%s0] sm:$0xff]
    %v34 = vld [vmem:[%s1] sm:$0xff]
    %36 = vrot.lane.b32.xlu0 %v34, 25
    %v37 = vpop.permute.xlu0 %36
    %vm39 = vcmask 203776
    %v40 = vsel %vm39, %v33, %v37
    %v41 = vpack.c.bf16 %v40, %v40
    %v42 = vld [vmem:[%s2] sm:$0xf]
    %v43 = vld [vmem:[%s2 + $0x4] sm:$0xf]
    %v44 = vld [vmem:[%s2 + $0x8] sm:$0xf]
    %v45 = vld [vmem:[%s2 + $0xc] sm:$0x7]
    %v46 = vld [vmem:[%s3] sm:$0x1]
    %v48 = vlaneseq
    %v49 = vshrl.u32 %v48, 7
    %v50 = vsub.s32 0, %v49
    %v51 = vrot.slane %v46, %v50
    %v57 = vunpack.c.l.b16 %v42
    %v58 = vunpack.c.l.b16 %v43
    %v59 = vunpack.c.l.b16 %v44
    %v60 = vunpack.c.l.b16 %v45
    %v61 = vpack.c.b16 %v58, %v57
    %v62 = vpack.c.b16 %v60, %v59
    %vm64 = vcmask 244736
    %v66 = vsel %vm64, %v41, 0
    %vm68 = vcmask 1046528
    %v70 = vsel %vm68, %v62, 0
    %72 = vmatprep.subr.bf16.mxu0 0
    %73 = vmatpush1.bf16.msra.mxu0 0
    %74 = vmatprep.subr.bf16.mxu0 0
    %75 = vmatpush1.bf16.msra.mxu0 0
    %76 = vmatprep.subr.bf16.mxu0 0
    %77 = vmatpush1.bf16.msra.mxu0 0
    %78 = vmatprep.subr.bf16.mxu0 0
    %79 = vmatpush1.bf16.msra.mxu0 0
    %80 = vmatprep.subr.bf16.mxu0 0
    %81 = vmatpush1.bf16.msra.mxu0 0
    %82 = vmatprep.subr.bf16.mxu0 0
    %83 = vmatpush1.bf16.msra.mxu0 0
    %84 = vmatprep.subr.bf16.mxu0 0
    %85 = vmatpush1.bf16.msra.mxu0 %v70
    %86 = vmatprep.subr.bf16.mxu0 0
    %87 = vmatpush1.bf16.msra.mxu0 %v61
    %88 = vmatprep.subr.bf16.mxu0 0
    %89 = vmatpush2.bf16.msra.mxu0 0
    %90 = vmatprep.subr.bf16.mxu0 0
    %91 = vmatpush2.bf16.msra.mxu0 0
    %92 = vmatprep.subr.bf16.mxu0 0
    %93 = vmatpush2.bf16.msra.mxu0 0
    %94 = vmatprep.subr.bf16.mxu0 0
    %95 = vmatpush2.bf16.msra.mxu0 0
    %96 = vmatprep.subr.bf16.mxu0 0
    %97 = vmatpush2.bf16.msra.mxu0 0
    %98 = vmatprep.subr.bf16.mxu0 0
    %99 = vmatpush2.bf16.msra.mxu0 0
    %100 = vmatprep.subr.bf16.mxu0 0
    %101 = vmatpush2.bf16.msra.mxu0 0
    %102 = vmatprep.subr.bf16.mxu0 0
    %103 = vmatpush2.bf16.msra.mxu0 0
    %104 = vmatprep.mubr.bf16.mxu0 0
    %105 = vmatmul.mubr.bf16.gmra.mxu0 %v66
    %v106 = vpop.f32.mrf.mxu0
    %v107 = vadd.f32 %v51, %v106
    %v108 = vpop.f32.mrf.mxu0
    %v109 = vpop.f32.mrf.mxu0
    %v110 = vpop.f32.mrf.mxu0
    %111 = vdwg.mxu0
    %v112 = vmax.f32 %v107, 0.0
    %v113 = vpack.c.bf16 %v112, %v112
    %v114 = vld [vmem:[%s4] sm:$0xf]
    %v115 = vld [vmem:[%s4 + $0x4] sm:$0xf]
    %v116 = vld [vmem:[%s4 + $0x8] sm:$0xf]
    %v117 = vld [vmem:[%s4 + $0xc] sm:$0xf]
    %v118 = vld [vmem:[%s4 + $0x10] sm:$0xf]
    %v119 = vld [vmem:[%s4 + $0x14] sm:$0xf]
    %v120 = vld [vmem:[%s4 + $0x18] sm:$0xf]
    %v121 = vld [vmem:[%s4 + $0x1c] sm:$0xf]
    %v122 = vld [vmem:[%s5] sm:$0x1]
    %v124 = vlaneseq
    %v125 = vshrl.u32 %v124, 7
    %v126 = vsub.s32 0, %v125
    %v127 = vrot.slane %v122, %v126
    %v137 = vunpack.c.l.b16 %v114
    %v138 = vunpack.c.l.b16 %v115
    %v139 = vunpack.c.l.b16 %v116
    %v140 = vunpack.c.l.b16 %v117
    %v141 = vunpack.c.l.b16 %v118
    %v142 = vunpack.c.l.b16 %v119
    %v143 = vunpack.c.l.b16 %v120
    %v144 = vunpack.c.l.b16 %v121
    %v145 = vpack.c.b16 %v138, %v137
    %v146 = vpack.c.b16 %v140, %v139
    %v147 = vpack.c.b16 %v142, %v141
    %v148 = vpack.c.b16 %v144, %v143
    %vm153 = vcmask 523264
    %v155 = vsel %vm153, %v113, 0
    %157 = vmatprep.subr.bf16.mxu0 0
    %158 = vmatpush1.bf16.msra.mxu0 0
    %159 = vmatprep.subr.bf16.mxu0 0
    %160 = vmatpush1.bf16.msra.mxu0 0
    %161 = vmatprep.subr.bf16.mxu0 0
    %162 = vmatpush1.bf16.msra.mxu0 0
    %163 = vmatprep.subr.bf16.mxu0 0
    %164 = vmatpush1.bf16.msra.mxu0 0
    %165 = vmatprep.subr.bf16.mxu0 0
    %166 = vmatpush1.bf16.msra.mxu0 %v148
    %167 = vmatprep.subr.bf16.mxu0 0
    %168 = vmatpush1.bf16.msra.mxu0 %v147
    %169 = vmatprep.subr.bf16.mxu0 0
    %170 = vmatpush1.bf16.msra.mxu0 %v146
    %171 = vmatprep.subr.bf16.mxu0 0
    %172 = vmatpush1.bf16.msra.mxu0 %v145
    %173 = vmatprep.subr.bf16.mxu0 0
    %174 = vmatpush2.bf16.msra.mxu0 0
    %175 = vmatprep.subr.bf16.mxu0 0
    %176 = vmatpush2.bf16.msra.mxu0 0
    %177 = vmatprep.subr.bf16.mxu0 0
    %178 = vmatpush2.bf16.msra.mxu0 0
    %179 = vmatprep.subr.bf16.mxu0 0
    %180 = vmatpush2.bf16.msra.mxu0 0
    %181 = vmatprep.subr.bf16.mxu0 0
    %182 = vmatpush2.bf16.msra.mxu0 0
    %183 = vmatprep.subr.bf16.mxu0 0
    %184 = vmatpush2.bf16.msra.mxu0 0
    %185 = vmatprep.subr.bf16.mxu0 0
    %186 = vmatpush2.bf16.msra.mxu0 0
    %187 = vmatprep.subr.bf16.mxu0 0
    %188 = vmatpush2.bf16.msra.mxu0 0
    %189 = vmatprep.mubr.bf16.mxu0 0
    %190 = vmatmul.mubr.bf16.gmra.mxu0 %v155
    %v191 = vpop.f32.mrf.mxu0
    %v192 = vadd.f32 %v127, %v191
    %v193 = vpop.f32.mrf.mxu0
    %v194 = vpop.f32.mrf.mxu0
    %v195 = vpop.f32.mrf.mxu0
    %196 = vdwg.mxu0
    %v197 = vmax.f32 %v192, 0.0
    %v198 = vld [vmem:[%s6] sm:$0x1]
    %v199 = vpack.c.bf16 %v197, %v197
    %v200 = vld [vmem:[#allocation2] sm:$0x1]
    %202 = vset.pattern.permute.xlu0 0
    %203 = vperm.xlu0 %202, %v200
    %v204 = vpop.permute.xlu0 %203
    %v206 = vlaneseq
    %v207 = vshrl.u32 %v206, 7
    %v208 = vsub.s32 0, %v207
    %v209 = vrot.slane %v204, %v208
    %vm210 = vcmask 261120
    %v212 = vsel %vm210, %v198, 0
    %v215 = vsel %vm210, %v199, 0
    %217 = vmatprep.subr.bf16.mxu0 0
    %218 = vmatpush1.bf16.xpose.msra.mxu0 0
    %219 = vmatprep.subr.bf16.mxu0 0
    %220 = vmatpush1.bf16.xpose.msra.mxu0 0
    %221 = vmatprep.subr.bf16.mxu0 0
    %222 = vmatpush1.bf16.xpose.msra.mxu0 0
    %223 = vmatprep.subr.bf16.mxu0 0
    %224 = vmatpush1.bf16.xpose.msra.mxu0 0
    %225 = vmatprep.subr.bf16.mxu0 0
    %226 = vmatpush1.bf16.xpose.msra.mxu0 0
    %227 = vmatprep.subr.bf16.mxu0 0
    %228 = vmatpush1.bf16.xpose.msra.mxu0 0
    %229 = vmatprep.subr.bf16.mxu0 0
    %230 = vmatpush1.bf16.xpose.msra.mxu0 0
    %231 = vmatprep.subr.bf16.mxu0 0
    %232 = vmatpush1.bf16.xpose.msra.mxu0 %v215
    %233 = vmatprep.subr.bf16.mxu0 0
    %234 = vmatpush2.bf16.xpose.msra.mxu0 0
    %235 = vmatprep.subr.bf16.mxu0 0
    %236 = vmatpush2.bf16.xpose.msra.mxu0 0
    %237 = vmatprep.subr.bf16.mxu0 0
    %238 = vmatpush2.bf16.xpose.msra.mxu0 0
    %239 = vmatprep.subr.bf16.mxu0 0
    %240 = vmatpush2.bf16.xpose.msra.mxu0 0
    %241 = vmatprep.subr.bf16.mxu0 0
    %242 = vmatpush2.bf16.xpose.msra.mxu0 0
    %243 = vmatprep.subr.bf16.mxu0 0
    %244 = vmatpush2.bf16.xpose.msra.mxu0 0
    %245 = vmatprep.subr.bf16.mxu0 0
    %246 = vmatpush2.bf16.xpose.msra.mxu0 0
    %247 = vmatprep.subr.bf16.mxu0 0
    %248 = vmatpush2.bf16.xpose.msra.mxu0 0
    %249 = vmatprep.mubr.bf16.mxu0 0
    %250 = vmatmul.mubr.bf16.gmra.mxu0 %v212
    %v251 = vpop.f32.mrf.mxu0
    %v252 = vadd.f32 %v209, %v251
    %v253 = vpop.f32.mrf.mxu0
    %v254 = vpop.f32.mrf.mxu0
    %v255 = vpop.f32.mrf.mxu0
    %256 = vdwg.mxu0
    %vm257 = vcmask 57344
    %258 = vst.msk [vmem:[#allocation3] sm:$0x1] %vm257, %v252
    // Predicated region
    $region34: #{critic_forward.1} parent=1 // pred_check
      _
    $region35: #{critic_forward.1} parent=1 // pred_check_branch
      %260 = sbr.rel (0) target = $region37
    $region36: #{critic_forward.1} parent=1 // pred_region
      %s262 = ssub.s32 16, 16
      %263 = vsyncadd [#allocation4], %s262
      %s265 = sshll.u32 [#allocation3], 4
      %s266 = int_to_ptr.vmem [resolvable:$true] %s265
      %268 = dma.vmem_to_hbm [thread:$0]  %s266, 16, %s8, [#allocation4]
    $region37: #{critic_forward.1} parent=1 // pred_fallthru
      _
    // Predicated region
    $region38: #{critic_forward.1} parent=1 // pred_check
      _
    $region39: #{critic_forward.1} parent=1 // pred_check_branch
      %270 = sbr.rel (0) target = $region41
    $region40: #{critic_forward.1} parent=1 // pred_region
      %271 = dma.done [#allocation4], 16
    $region41: #{critic_forward.1} parent=1 // pred_fallthru
      _
    %272 = vsyncpa [#allocation4], 1

</llo_original>
